<compile_context>
chip_gen: v5e
topology: v5e:2x2
jax: 0.10.0
libtpu: 0.0.40
codegen_flags: <defaults>
</compile_context>

<pallas_src>
import math

import jax
import jax.numpy as jnp
from jax.experimental import pallas as pl
from jax.experimental.pallas import tpu as pltpu


def _attention_kernel(q_ref, k_ref, v_ref, mask_ref, o_ref):
    # q_ref/k_ref/v_ref: (h_blk, S, D) bf16 tiles (Q already pre-scaled by
    # 1/sqrt(D) in the wrapper); mask_ref: (S, S) bf16; o_ref: (h_blk, S, D).
    q = q_ref[...]
    k = k_ref[...]
    v = v_ref[...]
    m = mask_ref[...].astype(jnp.float32)

    # Scores: batched over the head-block axis, no materialized k.T
    # (keeps the XLU slot free); f32 accumulation on the MXU.
    qk = jnp.einsum("hqd,hkd->hqk", q, k, preferred_element_type=jnp.float32)
    qk = qk + m[None, :, :]

    # Numerically stable softmax statistics in f32.
    row_max = jnp.max(qk, axis=-1, keepdims=True)
    p = jnp.exp(qk - row_max)                         # f32 (h, S, S)
    denom = jnp.sum(p, axis=-1, keepdims=True)        # f32 (h, S, 1)

    # Unnormalized attn @ V first, then normalize the (h, S, D) result; this
    # avoids compounding the approx-reciprocal error with bf16 rounding of p.
    out = jnp.einsum(
        "hqk,hkd->hqd", p.astype(jnp.bfloat16), v,
        preferred_element_type=jnp.float32,
    )
    out = out * pl.reciprocal(denom, approx=True)      # EUP slot, ~free
    o_ref[...] = out.astype(o_ref.dtype)


def _pick_h_blk(B, H, S, D, *, vmem_budget_bytes=8 * 1024 * 1024):
    """Largest head-block dividing H whose per-step working set fits the VMEM
    budget, preferring B * (H // h_blk) >= 4 total grid blocks (two steps per
    v7x TensorCore for DMA/compute pipelining), falling back to >= 2, then 1."""
    tile = S * D
    # Per head: double-buffered bf16 Q/K/V tiles + f32 output tile, plus a few
    # live f32 (S, S) score/probability temporaries.
    per_head = 2 * (3 * tile * 2 + tile * 4) + 3 * S * S * 4
    max_by_vmem = max(1, vmem_budget_bytes // per_head)

    for min_blocks in (4, 2, 1):
        cands = [
            c for c in range(1, H + 1)
            if H % c == 0 and c <= max_by_vmem and B * (H // c) >= min_blocks
        ]
        if cands:
            return max(cands)
    return 1


def sdpa_pallas(Q, K, V, mask, *, h_blk=None):
    """Scaled-dot-product attention with additive mask.

    Q, K, V: (B, H, S, D); mask: (B, S, S). Returns (B, H, S, D) in Q.dtype.
    """
    B, H, S, D = Q.shape
    assert K.shape == (B, H, S, D) and V.shape == (B, H, S, D)
    assert mask.shape == (B, S, S)
    out_dtype = Q.dtype

    if h_blk is None:
        h_blk = _pick_h_blk(B, H, S, D)
    assert H % h_blk == 0
    n_hblk = H // h_blk

    # bf16 I/O: halves the dominant HBM read traffic.  Fold 1/sqrt(D) into the
    # same producer-side pass as the cast (mul + convert fuse in XLA).
    scale = 1.0 / math.sqrt(D)
    Qb = (Q.astype(jnp.float32) * scale).astype(jnp.bfloat16)
    Kb = K.astype(jnp.bfloat16)
    Vb = V.astype(jnp.bfloat16)
    Mb = mask.astype(jnp.bfloat16)

    # Grid: (batch, head-block).  Head axis fastest-varying so the mask block
    # index is constant across consecutive steps (mask not re-DMA'd per step).
    qkv_spec = pl.BlockSpec(
        (pl.Squeezed(), h_blk, S, D), lambda b, h: (b, h, 0, 0)
    )
    mask_spec = pl.BlockSpec((pl.Squeezed(), S, S), lambda b, h: (b, 0, 0))
    out_spec = pl.BlockSpec(
        (pl.Squeezed(), h_blk, S, D), lambda b, h: (b, h, 0, 0)
    )

    # VMEM working-set estimate (double-buffered tiles + f32 score temps) with
    # 2x headroom; matters mostly on v5e's 16 MiB scoped default.
    out_isz = jnp.dtype(out_dtype).itemsize
    tile = h_blk * S * D
    vmem_est = (
        2 * (3 * tile * 2 + tile * out_isz)   # double-buffered bf16 in + out tiles
        + 2 * S * S * 2                       # double-buffered bf16 mask
        + 4 * h_blk * S * S * 4               # live f32 qk / p temporaries
    )
    vmem_limit = int(min(max(2 * vmem_est, 16 * 1024 * 1024), 48 * 1024 * 1024))

    # Advisory cost estimate; account for bf16 I/O and (8, 128) lane padding of
    # the minor dims so memory time is not understated.
    def _pad(n, m):
        return ((n + m - 1) // m) * m

    flops = 2 * 2 * B * H * S * S * D            # two matmuls
    transcendentals = B * H * S * S              # exp per score
    bytes_accessed = (
        3 * B * H * _pad(S, 8) * _pad(D, 128) * 2         # Q, K, V (bf16)
        + B * H * _pad(S, 8) * _pad(D, 128) * out_isz     # output
        + B * _pad(S, 8) * _pad(S, 128) * 2               # mask (bf16)
    )

    return pl.pallas_call(
        _attention_kernel,
        out_shape=jax.ShapeDtypeStruct((B, H, S, D), out_dtype),
        grid_spec=pltpu.PrefetchScalarGridSpec(
            num_scalar_prefetch=0,
            grid=(B, n_hblk),
            in_specs=[qkv_spec, qkv_spec, qkv_spec, mask_spec],
            out_specs=out_spec,
        ),
        compiler_params=pltpu.CompilerParams(
            dimension_semantics=("parallel", "parallel"),
            vmem_limit_bytes=vmem_limit,
        ),
        cost_estimate=pl.CostEstimate(
            flops=flops,
            transcendentals=transcendentals,
            bytes_accessed=bytes_accessed,
        ),
    )(Qb, Kb, Vb, Mb)


def sdpa_reference(Q, K, V, mask):
    scale = 1.0 / math.sqrt(Q.shape[-1])
    qk = jnp.einsum("bhqd,bhkd->bhqk", Q, K) * scale
    qk = qk + mask[:, None, :, :]
    attn = jax.nn.softmax(qk, axis=-1)
    return jnp.einsum("bhqk,bhkd->bhqd", attn, V)


if __name__ == "__main__":
    # Small shapes consistent with the module's (B, H, S, D) convention
    # (module used (1, 64, 56, 56); keep the odd 56 spatial dims, fewer heads).
    B, H, S, D = 2, 8, 56, 56

    key = jax.random.PRNGKey(0)
    kq, kk, kv, km = jax.random.split(key, 4)
    Q = jax.random.normal(kq, (B, H, S, D), dtype=jnp.float32)
    K = jax.random.normal(kk, (B, H, S, D), dtype=jnp.float32)
    V = jax.random.normal(kv, (B, H, S, D), dtype=jnp.float32)
    # Additive mask, broadcast over heads (large negative where "masked out").
    mask = jnp.where(
        jax.random.uniform(km, (B, S, S)) > 0.7,
        jnp.float32(-1e9),
        jnp.float32(0.0),
    )

    out = jax.block_until_ready(sdpa_pallas(Q, K, V, mask))
    ref = sdpa_reference(Q, K, V, mask)

    assert out.shape == (B, H, S, D)
    # bf16 MXU operands / bf16 I/O with f32 accumulation -> ~1e-2 tolerance.
    assert jnp.allclose(out, ref, atol=3e-2, rtol=3e-2), (
        "mismatch vs reference; max abs err = "
        f"{float(jnp.max(jnp.abs(out - ref)))}"
    )

    print("KERNEL_OK")
</pallas_src>

<mosaic_0001>
module attributes {stable_mosaic.version = 11 : i64} {
  func.func @_attention_kernel(%arg0: i32, %arg1: i32, %arg2: memref<1x4x56x56xbf16, #tpu.memory_space<vmem>>, %arg3: memref<1x4x56x56xbf16, #tpu.memory_space<vmem>>, %arg4: memref<1x4x56x56xbf16, #tpu.memory_space<vmem>>, %arg5: memref<1x56x56xbf16, #tpu.memory_space<vmem>>, %arg6: memref<1x4x56x56xf32, #tpu.memory_space<vmem>>) attributes {dimension_semantics = [#tpu.dimension_semantics<parallel>, #tpu.dimension_semantics<parallel>], iteration_bounds = array<i64: 2, 2>, scalar_prefetch = 0 : i64, scratch_operands = 0 : i64, tpu.core_type = #tpu.core_type<tc>, window_params = [{transform_indices = @transform_0, window_bounds = array<i64: 1, 4, 56, 56>}, {transform_indices = @transform_1, window_bounds = array<i64: 1, 4, 56, 56>}, {transform_indices = @transform_2, window_bounds = array<i64: 1, 4, 56, 56>}, {transform_indices = @transform_3, window_bounds = array<i64: 1, 56, 56>}, {transform_indices = @transform_4, window_bounds = array<i64: 1, 4, 56, 56>}]} {
    %c0 = arith.constant 0 : index
    %c0_0 = arith.constant 0 : index
    %c0_1 = arith.constant 0 : index
    %c0_2 = arith.constant 0 : index
    %0 = vector.load %arg2[%c0, %c0_0, %c0_1, %c0_2] : memref<1x4x56x56xbf16, #tpu.memory_space<vmem>>, vector<1x4x56x56xbf16>
    %1 = vector.shape_cast %0 : vector<1x4x56x56xbf16> to vector<4x56x56xbf16>
    %c0_3 = arith.constant 0 : index
    %c0_4 = arith.constant 0 : index
    %c0_5 = arith.constant 0 : index
    %c0_6 = arith.constant 0 : index
    %2 = vector.load %arg3[%c0_3, %c0_4, %c0_5, %c0_6] : memref<1x4x56x56xbf16, #tpu.memory_space<vmem>>, vector<1x4x56x56xbf16>
    %3 = vector.shape_cast %2 : vector<1x4x56x56xbf16> to vector<4x56x56xbf16>
    %c0_7 = arith.constant 0 : index
    %c0_8 = arith.constant 0 : index
    %c0_9 = arith.constant 0 : index
    %c0_10 = arith.constant 0 : index
    %4 = vector.load %arg4[%c0_7, %c0_8, %c0_9, %c0_10] : memref<1x4x56x56xbf16, #tpu.memory_space<vmem>>, vector<1x4x56x56xbf16>
    %5 = vector.shape_cast %4 : vector<1x4x56x56xbf16> to vector<4x56x56xbf16>
    %c0_11 = arith.constant 0 : index
    %c0_12 = arith.constant 0 : index
    %c0_13 = arith.constant 0 : index
    %6 = vector.load %arg5[%c0_11, %c0_12, %c0_13] : memref<1x56x56xbf16, #tpu.memory_space<vmem>>, vector<1x56x56xbf16>
    %7 = vector.shape_cast %6 : vector<1x56x56xbf16> to vector<56x56xbf16>
    %8 = arith.extf %7 : vector<56x56xbf16> to vector<56x56xf32>
    "tpu.trace_start"() <{level = 10 : i32, message = "hqd,hkd->hqk"}> : () -> ()
    %cst = arith.constant dense<0.000000e+00> : vector<4x56x56xf32>
    %9 = tpu.matmul %1, %3, %cst {dimension_numbers = #tpu.dot_dimension_numbers<[2], [2], [1], [1], [0, 0, 0, 1, 1, 1], [0], [0]>} : vector<4x56x56xbf16>, vector<4x56x56xbf16>, vector<4x56x56xf32> -> vector<4x56x56xf32>
    "tpu.trace_stop"() : () -> ()
    %10 = vector.shape_cast %8 : vector<56x56xf32> to vector<1x56x56xf32>
    %11 = vector.broadcast %10 : vector<1x56x56xf32> to vector<4x56x56xf32>
    %12 = arith.addf %9, %11 : vector<4x56x56xf32>
    %cst_14 = arith.constant dense<0xFF800000> : vector<4x56xf32>
    %13 = vector.multi_reduction <maximumf>, %12, %cst_14 [2] : vector<4x56x56xf32> to vector<4x56xf32>
    %14 = vector.shape_cast %13 : vector<4x56xf32> to vector<4x56x1xf32>
    %15 = vector.broadcast %14 : vector<4x56x1xf32> to vector<4x56x56xf32>
    %16 = arith.subf %12, %15 : vector<4x56x56xf32>
    %17 = math.exp %16 : vector<4x56x56xf32>
    %cst_15 = arith.constant dense<0.000000e+00> : vector<4x56xf32>
    %18 = vector.multi_reduction <add>, %17, %cst_15 [2] : vector<4x56x56xf32> to vector<4x56xf32>
    %19 = vector.shape_cast %18 : vector<4x56xf32> to vector<4x56x1xf32>
    %20 = arith.truncf %17 : vector<4x56x56xf32> to vector<4x56x56xbf16>
    "tpu.trace_start"() <{level = 10 : i32, message = "hqk,hkd->hqd"}> : () -> ()
    %cst_16 = arith.constant dense<0.000000e+00> : vector<4x56x56xf32>
    %21 = tpu.matmul %20, %5, %cst_16 {dimension_numbers = #tpu.dot_dimension_numbers<[2], [1], [1], [2], [0, 0, 0, 1, 1, 2], [0], [0]>} : vector<4x56x56xbf16>, vector<4x56x56xbf16>, vector<4x56x56xf32> -> vector<4x56x56xf32>
    "tpu.trace_stop"() : () -> ()
    %22 = tpu.reciprocal %19 {approx = true} : vector<4x56x1xf32> -> vector<4x56x1xf32>
    %23 = vector.broadcast %22 : vector<4x56x1xf32> to vector<4x56x56xf32>
    %24 = arith.mulf %21, %23 : vector<4x56x56xf32>
    %c0_17 = arith.constant 0 : index
    %c0_18 = arith.constant 0 : index
    %c0_19 = arith.constant 0 : index
    %c0_20 = arith.constant 0 : index
    %25 = vector.load %arg6[%c0_17, %c0_18, %c0_19, %c0_20] : memref<1x4x56x56xf32, #tpu.memory_space<vmem>>, vector<1x4x56x56xf32>
    %26 = vector.shape_cast %25 : vector<1x4x56x56xf32> to vector<4x56x56xf32>
    %27 = vector.shape_cast %24 : vector<4x56x56xf32> to vector<1x4x56x56xf32>
    tpu.vector_store %arg6[%c0_17, %c0_18, %c0_19, %c0_20], %27 {strides = array<i32>} : memref<1x4x56x56xf32, #tpu.memory_space<vmem>>, vector<1x4x56x56xf32>,
    return
  }
  func.func @transform_0(%arg0: i32, %arg1: i32) -> (i32, i32, i32, i32) {
    %c0_i32 = arith.constant 0 : i32
    %c0_i32_0 = arith.constant 0 : i32
    %c0_i32_1 = arith.constant 0 : i32
    return %arg0, %arg1, %c0_i32, %c0_i32_0 : i32, i32, i32, i32
  }
  func.func @transform_1(%arg0: i32, %arg1: i32) -> (i32, i32, i32, i32) {
    %c0_i32 = arith.constant 0 : i32
    %c0_i32_0 = arith.constant 0 : i32
    %c0_i32_1 = arith.constant 0 : i32
    return %arg0, %arg1, %c0_i32, %c0_i32_0 : i32, i32, i32, i32
  }
  func.func @transform_2(%arg0: i32, %arg1: i32) -> (i32, i32, i32, i32) {
    %c0_i32 = arith.constant 0 : i32
    %c0_i32_0 = arith.constant 0 : i32
    %c0_i32_1 = arith.constant 0 : i32
    return %arg0, %arg1, %c0_i32, %c0_i32_0 : i32, i32, i32, i32
  }
  func.func @transform_3(%arg0: i32, %arg1: i32) -> (i32, i32, i32) {
    %c0_i32 = arith.constant 0 : i32
    %c0_i32_0 = arith.constant 0 : i32
    %c0_i32_1 = arith.constant 0 : i32
    return %arg0, %c0_i32, %c0_i32_0 : i32, i32, i32
  }
  func.func @transform_4(%arg0: i32, %arg1: i32) -> (i32, i32, i32, i32) {
    %c0_i32 = arith.constant 0 : i32
    %c0_i32_0 = arith.constant 0 : i32
    %c0_i32_1 = arith.constant 0 : i32
    return %arg0, %arg1, %c0_i32, %c0_i32_0 : i32, i32, i32, i32
  }
}

</mosaic_0001>

<llo_original>
// kernel: tpu_custom_call.1
$region0: #{tpu_custom_call.1}
  #allocation0 [shape = 'u32[]', space=smem, size = 0x4, offset = 0x4, fixed_abs, tag = 'smem constant byte address 0x4 - core index']
  #allocation1 [shape = 'u32[72,128]{1,0:T(1,128)}', space=vmem, size = 0x9000, scoped, tag = 'internal scratch']
  %s0 = inlined_call_operand.hbm [shape: bf16[2,8,56,56], index: 0, kind: input, shape index: {}]
  %s1 = inlined_call_operand.hbm [shape: bf16[2,8,56,56], index: 1, kind: input, shape index: {}]
  %s2 = inlined_call_operand.hbm [shape: bf16[2,8,56,56], index: 2, kind: input, shape index: {}]
  %s3 = inlined_call_operand.hbm [shape: bf16[2,56,56], index: 3, kind: input, shape index: {}]
  %s4 = inlined_call_operand.hbm [shape: f32[2,8,56,56], index: 4, kind: output, shape index: {}]
  %s5 = sld [smem:[#allocation0]]
  $region65: #{tpu_custom_call.1} parent=0
    _
  %s7 = ssub.s32 1, %s5
  %s8 = scalar_select 0, %s7, %s5
  $region1: #{tpu_custom_call.1} parent=0
    #allocation2 [shape = 'u8[114688]{0}', space=vmem, size = 0x1c000, scoped, tag = 'input window, operand 0']
    #allocation3 [shape = 's32[2]{0}', space=sflag, size = 0x8, scoped, tag = 'scoped memory for tpu_custom_call.1']
    #allocation4 [shape = 's32[2]{0}', space=sflag, size = 0x8, scoped, tag = 'scoped memory for tpu_custom_call.1']
    #allocation5 [shape = 'u8[114688]{0}', space=vmem, size = 0x1c000, scoped, tag = 'input window, operand 1']
    #allocation6 [shape = 's32[2]{0}', space=sflag, size = 0x8, scoped, tag = 'scoped memory for tpu_custom_call.1']
    #allocation7 [shape = 'u8[114688]{0}', space=vmem, size = 0x1c000, scoped, tag = 'input window, operand 2']
    #allocation8 [shape = 'u8[28672]{0}', space=vmem, size = 0x7000, scoped, tag = 'input window, operand 3']
    #allocation9 [shape = 's32[2]{0}', space=sflag, size = 0x8, scoped, tag = 'scoped memory for tpu_custom_call.1']
    #allocation10 [shape = 'u8[229376]{0}', space=vmem, size = 0x38000, scoped, tag = 'output window, operand 0']
    %9 = vsyncpa [#allocation3], 0
    %s10 = scalar_lea.sflag [#allocation3], 1
    %11 = vsyncpa %s10, 0
    %12 = vsyncpa [#allocation6], 0
    %s13 = scalar_lea.sflag [#allocation6], 1
    %14 = vsyncpa %s13, 0
    %15 = vsyncpa [#allocation9], 0
    %s16 = scalar_lea.sflag [#allocation9], 1
    %17 = vsyncpa %s16, 0
    %18 = vsyncpa [#allocation4], 0
    %s19 = scalar_lea.sflag [#allocation4], 1
    %20 = vsyncpa %s19, 0
    loop: start=0, step=1, limit=6
    $region2: #{tpu_custom_call.1} parent=1 // loop_pre_header
      _
    $region3: #{tpu_custom_call.1} parent=1 // loop_header
      %s22 = sphi 0, %s26
      %p23 = scmp.ge.s32.totalorder %s22, 6
      %s29 = sphi 0, %s41
      %s30 = sphi 0, %s37
      %s31 = sphi 0, %s29
      %s32 = sphi 0, %s30
      %s33 = sphi 0, %s31
      %s34 = sphi 0, %s32
      %s46 = sphi 0, %s48
      %s49 = sphi 0, %s46
      %s50 = sphi 0, %s49
      %s66 = sphi 0, %s50
      %s74 = sphi 0, %s76
      %s77 = sphi 0, %s74
      %s78 = sphi 0, %s77
      %s94 = sphi 0, %s78
      %s102 = sphi 0, %s104
      %s105 = sphi 0, %s102
      %s106 = sphi 0, %s105
      %s122 = sphi 0, %s106
      %s128 = sphi 0, %s130
      %s131 = sphi 0, %s128
      %s132 = sphi 0, %s131
      %s148 = sphi 0, %s132
      %s156 = sphi 0, %s158
      %s159 = sphi 0, %s156
      %s160 = sphi 0, %s159
      %s176 = sphi 0, %s160
    $region4: #{tpu_custom_call.1} parent=1 // loop_header_branch
      %25 = sbr.rel (%p23) target = $region8
    $region5: #{tpu_custom_call.1} parent=1 // loop_body
      %s27 = ssub.s32 %s22, 1
      %s28 = ssub.s32 %s22, 2
      %s35 = sadd.s32 1, %s30
      %p36 = scmp.ge.s32.totalorder %s35, 2
      %s37 = scalar_select %p36, 0, %s35
      %s38 = sadd.s32 1, %s29
      %s39 = scalar_select %p36, %s38, %s29
      %p40 = scmp.ge.s32.totalorder %s39, 2
      %s41 = scalar_select %p40, 0, %s39
      %s42 = ssub.s32 %s29, %s41
      %s43 = ssub.s32 %s30, %s37
      %s44 = sor.u32 %s42, %s43
      %p45 = scmp.eq.s32.totalorder %s44, 0
      %s47 = sadd.s32 %s46, 1
      %s48 = scalar_select %p45, %s46, %s47
      %p51 = pneg %p45
      %p52 = scmp.eq.s32.totalorder %s22, 3
      %p53 = por %p51, %p52
      %p54 = scmp.ne.s32.totalorder %s46, %s49
      %p55 = scmp.eq.s32.totalorder %s22, 0
      %p56 = por %p54, %p55
      %p57 = scmp.ne.s32.totalorder %s46, %s49
      %p58 = scmp.eq.s32.totalorder %s27, 3
      %p59 = por %p57, %p58
      %p60 = scmp.ne.s32.totalorder %s49, %s50
      %p61 = scmp.eq.s32.totalorder %s27, 0
      %p62 = por %p60, %p61
      %p63 = scmp.ne.s32.totalorder %s49, %s50
      %p64 = scmp.eq.s32.totalorder %s28, 3
      %p65 = por %p63, %p64
      %p67 = scmp.ne.s32.totalorder %s50, %s66
      %p68 = scmp.eq.s32.totalorder %s28, 0
      %p69 = por %p67, %p68
      %s70 = ssub.s32 %s29, %s41
      %s71 = ssub.s32 %s30, %s37
      %s72 = sor.u32 %s70, %s71
      %p73 = scmp.eq.s32.totalorder %s72, 0
      %s75 = sadd.s32 %s74, 1
      %s76 = scalar_select %p73, %s74, %s75
      %p79 = pneg %p73
      %p80 = scmp.eq.s32.totalorder %s22, 3
      %p81 = por %p79, %p80
      %p82 = scmp.ne.s32.totalorder %s74, %s77
      %p83 = scmp.eq.s32.totalorder %s22, 0
      %p84 = por %p82, %p83
      %p85 = scmp.ne.s32.totalorder %s74, %s77
      %p86 = scmp.eq.s32.totalorder %s27, 3
      %p87 = por %p85, %p86
      %p88 = scmp.ne.s32.totalorder %s77, %s78
      %p89 = scmp.eq.s32.totalorder %s27, 0
      %p90 = por %p88, %p89
      %p91 = scmp.ne.s32.totalorder %s77, %s78
      %p92 = scmp.eq.s32.totalorder %s28, 3
      %p93 = por %p91, %p92
      %p95 = scmp.ne.s32.totalorder %s78, %s94
      %p96 = scmp.eq.s32.totalorder %s28, 0
      %p97 = por %p95, %p96
      %s98 = ssub.s32 %s29, %s41
      %s99 = ssub.s32 %s30, %s37
      %s100 = sor.u32 %s98, %s99
      %p101 = scmp.eq.s32.totalorder %s100, 0
      %s103 = sadd.s32 %s102, 1
      %s104 = scalar_select %p101, %s102, %s103
      %p107 = pneg %p101
      %p108 = scmp.eq.s32.totalorder %s22, 3
      %p109 = por %p107, %p108
      %p110 = scmp.ne.s32.totalorder %s102, %s105
      %p111 = scmp.eq.s32.totalorder %s22, 0
      %p112 = por %p110, %p111
      %p113 = scmp.ne.s32.totalorder %s102, %s105
      %p114 = scmp.eq.s32.totalorder %s27, 3
      %p115 = por %p113, %p114
      %p116 = scmp.ne.s32.totalorder %s105, %s106
      %p117 = scmp.eq.s32.totalorder %s27, 0
      %p118 = por %p116, %p117
      %p119 = scmp.ne.s32.totalorder %s105, %s106
      %p120 = scmp.eq.s32.totalorder %s28, 3
      %p121 = por %p119, %p120
      %p123 = scmp.ne.s32.totalorder %s106, %s122
      %p124 = scmp.eq.s32.totalorder %s28, 0
      %p125 = por %p123, %p124
      %s126 = ssub.s32 %s29, %s41
      %p127 = scmp.eq.s32.totalorder %s126, 0
      %s129 = sadd.s32 %s128, 1
      %s130 = scalar_select %p127, %s128, %s129
      %p133 = pneg %p127
      %p134 = scmp.eq.s32.totalorder %s22, 3
      %p135 = por %p133, %p134
      %p136 = scmp.ne.s32.totalorder %s128, %s131
      %p137 = scmp.eq.s32.totalorder %s22, 0
      %p138 = por %p136, %p137
      %p139 = scmp.ne.s32.totalorder %s128, %s131
      %p140 = scmp.eq.s32.totalorder %s27, 3
      %p141 = por %p139, %p140
      %p142 = scmp.ne.s32.totalorder %s131, %s132
      %p143 = scmp.eq.s32.totalorder %s27, 0
      %p144 = por %p142, %p143
      %p145 = scmp.ne.s32.totalorder %s131, %s132
      %p146 = scmp.eq.s32.totalorder %s28, 3
      %p147 = por %p145, %p146
      %p149 = scmp.ne.s32.totalorder %s132, %s148
      %p150 = scmp.eq.s32.totalorder %s28, 0
      %p151 = por %p149, %p150
      %s152 = ssub.s32 %s29, %s41
      %s153 = ssub.s32 %s30, %s37
      %s154 = sor.u32 %s152, %s153
      %p155 = scmp.eq.s32.totalorder %s154, 0
      %s157 = sadd.s32 %s156, 1
      %s158 = scalar_select %p155, %s156, %s157
      %p161 = pneg %p155
      %p162 = scmp.eq.s32.totalorder %s22, 3
      %p163 = por %p161, %p162
      %p164 = scmp.ne.s32.totalorder %s156, %s159
      %p165 = scmp.eq.s32.totalorder %s22, 0
      %p166 = por %p164, %p165
      %p167 = scmp.ne.s32.totalorder %s156, %s159
      %p168 = scmp.eq.s32.totalorder %s27, 3
      %p169 = por %p167, %p168
      %p170 = scmp.ne.s32.totalorder %s159, %s160
      %p171 = scmp.eq.s32.totalorder %s27, 0
      %p172 = por %p170, %p171
      %p173 = scmp.ne.s32.totalorder %s159, %s160
      %p174 = scmp.eq.s32.totalorder %s28, 3
      %p175 = por %p173, %p174
      %p177 = scmp.ne.s32.totalorder %s160, %s176
      %p178 = scmp.eq.s32.totalorder %s28, 0
      %p179 = por %p177, %p178
      %p180 = scmp.le.s32.totalorder 1, %s22
      %p181 = scmp.lt.s32.totalorder %s22, 5
      %p182 = pnand %p180, %p181
      %p183 = pneg %p182
      // Predicated region
      $region9: #{tpu_custom_call.1} parent=5 // pred_check
        _
      $region10: #{tpu_custom_call.1} parent=5 // pred_check_branch
        %185 = sbr.rel (%p182) target = $region12
      $region11: #{tpu_custom_call.1} parent=5 // pred_region
        %s186 = ssub.s32 %s22, 1
      $region12: #{tpu_custom_call.1} parent=5 // pred_fallthru
        _
      %p187 = scmp.lt.s32.totalorder %s22, 4
      // Predicated region
      $region13: #{tpu_custom_call.1} parent=5 // pred_check
        %p188 = pneg %p187
      $region14: #{tpu_custom_call.1} parent=5 // pred_check_branch
        %190 = sbr.rel (%p188) target = $region16
      $region15: #{tpu_custom_call.1} parent=5 // pred_region
        // Predicated region
        $region17: #{tpu_custom_call.1} parent=15 // pred_check
          %p191 = pneg %p56
        $region18: #{tpu_custom_call.1} parent=15 // pred_check_branch
          %193 = sbr.rel (%p191) target = $region20
        $region19: #{tpu_custom_call.1} parent=15 // pred_region
          %s194 = sand.u32 %s46, 1
          %s195 = scalar_lea.sflag [#allocation3], %s194
          %s196 = sand.u32 %s46, 1
          %s197 = smul.addr %s196, 112
          %s198 = scalar_lea.vmem [#allocation2], %s197
          %s199 = smul.u32 4, %s30
          %201 = vsyncadd %s195, 0
          %s202 = smul.addr %s199, 7
          %s203 = smul.addr %s29, 56
          %s204 = sadd.s32 %s202, %s203
          %s205 = smul.addr %s204, 4
          %s206 = scalar_lea.hbm %s0, %s205
          %s207 = sshll.u32 %s206, 4
          %s208 = int_to_ptr.hbm [resolvable:$true] %s207
          %s209 = sshll.u32 %s198, 4
          %s210 = int_to_ptr.vmem [resolvable:$true] %s209
          %215 = dma.hbm_to_vmem [thread:$0]  %s208, 1792, %s210, %s195, 64, 64, 4
        $region20: #{tpu_custom_call.1} parent=15 // pred_fallthru
          _
        // Predicated region
        $region21: #{tpu_custom_call.1} parent=15 // pred_check
          %p216 = pneg %p84
        $region22: #{tpu_custom_call.1} parent=15 // pred_check_branch
          %218 = sbr.rel (%p216) target = $region24
        $region23: #{tpu_custom_call.1} parent=15 // pred_region
          %s219 = sand.u32 %s22, 1
          %s220 = scalar_lea.sflag [#allocation6], %s219
          %s221 = sand.u32 %s74, 1
          %s222 = smul.addr %s221, 112
          %s223 = scalar_lea.vmem [#allocation5], %s222
          %s224 = smul.u32 4, %s30
          %226 = vsyncadd %s220, 0
          %s227 = smul.addr %s224, 7
          %s228 = smul.addr %s29, 56
          %s229 = sadd.s32 %s227, %s228
          %s230 = smul.addr %s229, 4
          %s231 = scalar_lea.hbm %s1, %s230
          %s232 = sshll.u32 %s231, 4
          %s233 = int_to_ptr.hbm [resolvable:$true] %s232
          %s234 = sshll.u32 %s223, 4
          %s235 = int_to_ptr.vmem [resolvable:$true] %s234
          %240 = dma.hbm_to_vmem [thread:$0]  %s233, 1792, %s235, %s220, 64, 64, 4
        $region24: #{tpu_custom_call.1} parent=15 // pred_fallthru
          _
        // Predicated region
        $region25: #{tpu_custom_call.1} parent=15 // pred_check
          %p241 = pneg %p112
        $region26: #{tpu_custom_call.1} parent=15 // pred_check_branch
          %243 = sbr.rel (%p241) target = $region28
        $region27: #{tpu_custom_call.1} parent=15 // pred_region
          %s244 = sand.u32 %s22, 1
          %s245 = scalar_lea.sflag [#allocation6], %s244
          %s246 = sand.u32 %s102, 1
          %s247 = smul.addr %s246, 112
          %s248 = scalar_lea.vmem [#allocation7], %s247
          %s249 = smul.u32 4, %s30
          %251 = vsyncadd %s245, 0
          %s252 = smul.addr %s249, 7
          %s253 = smul.addr %s29, 56
          %s254 = sadd.s32 %s252, %s253
          %s255 = smul.addr %s254, 4
          %s256 = scalar_lea.hbm %s2, %s255
          %s257 = sshll.u32 %s256, 4
          %s258 = int_to_ptr.hbm [resolvable:$true] %s257
          %s259 = sshll.u32 %s248, 4
          %s260 = int_to_ptr.vmem [resolvable:$true] %s259
          %265 = dma.hbm_to_vmem [thread:$0]  %s258, 1792, %s260, %s245, 64, 64, 4
        $region28: #{tpu_custom_call.1} parent=15 // pred_fallthru
          _
        // Predicated region
        $region29: #{tpu_custom_call.1} parent=15 // pred_check
          %p266 = pneg %p138
        $region30: #{tpu_custom_call.1} parent=15 // pred_check_branch
          %268 = sbr.rel (%p266) target = $region32
        $region31: #{tpu_custom_call.1} parent=15 // pred_region
          %s269 = sand.u32 %s128, 1
          %s270 = scalar_lea.sflag [#allocation9], %s269
          %s271 = sand.u32 %s128, 1
          %s272 = smul.addr %s271, 28
          %s273 = scalar_lea.vmem [#allocation8], %s272
          %275 = vsyncadd %s270, 0
          %s276 = smul.addr %s29, 7
          %s277 = smul.addr %s276, 4
          %s278 = scalar_lea.hbm %s3, %s277
          %s279 = sshll.u32 %s278, 4
          %s280 = int_to_ptr.hbm [resolvable:$true] %s279
          %s281 = sshll.u32 %s273, 4
          %s282 = int_to_ptr.vmem [resolvable:$true] %s281
          %287 = dma.hbm_to_vmem [thread:$0]  %s280, 448, %s282, %s270, 64, 64, 4
        $region32: #{tpu_custom_call.1} parent=15 // pred_fallthru
          _
      $region16: #{tpu_custom_call.1} parent=5 // pred_fallthru
        _
      %p288 = scmp.le.s32.totalorder 1, %s22
      %p289 = scmp.lt.s32.totalorder %s22, 5
      %p290 = pnand %p288, %p289
      %p291 = pneg %p290
      // Predicated region
      $region33: #{tpu_custom_call.1} parent=5 // pred_check
        _
      $region34: #{tpu_custom_call.1} parent=5 // pred_check_branch
        %293 = sbr.rel (%p290) target = $region36
      $region35: #{tpu_custom_call.1} parent=5 // pred_region
        %s294 = ssub.s32 %s22, 1
        %s295 = sand.u32 %s49, 1
        %s296 = scalar_lea.sflag [#allocation3], %s295
        %s297 = sand.u32 %s49, 1
        %s298 = smul.addr %s297, 112
        %s299 = scalar_lea.vmem [#allocation2], %s298
        // Predicated region
        $region37: #{tpu_custom_call.1} parent=35 // pred_check
          %p300 = pneg %p62
        $region38: #{tpu_custom_call.1} parent=35 // pred_check_branch
          %302 = sbr.rel (%p300) target = $region40
        $region39: #{tpu_custom_call.1} parent=35 // pred_region
          %304 = dma.done %s296, 1792
        $region40: #{tpu_custom_call.1} parent=35 // pred_fallthru
          _
        %s305 = sand.u32 %s27, 1
        %s306 = scalar_lea.sflag [#allocation6], %s305
        %s307 = sand.u32 %s77, 1
        %s308 = smul.addr %s307, 112
        %s309 = scalar_lea.vmem [#allocation5], %s308
        // Predicated region
        $region41: #{tpu_custom_call.1} parent=35 // pred_check
          %p310 = pneg %p90
        $region42: #{tpu_custom_call.1} parent=35 // pred_check_branch
          %312 = sbr.rel (%p310) target = $region44
        $region43: #{tpu_custom_call.1} parent=35 // pred_region
          %314 = dma.done %s306, 1792
        $region44: #{tpu_custom_call.1} parent=35 // pred_fallthru
          _
        %s315 = sand.u32 %s27, 1
        %s316 = scalar_lea.sflag [#allocation6], %s315
        %s317 = sand.u32 %s105, 1
        %s318 = smul.addr %s317, 112
        %s319 = scalar_lea.vmem [#allocation7], %s318
        // Predicated region
        $region45: #{tpu_custom_call.1} parent=35 // pred_check
          %p320 = pneg %p118
        $region46: #{tpu_custom_call.1} parent=35 // pred_check_branch
          %322 = sbr.rel (%p320) target = $region48
        $region47: #{tpu_custom_call.1} parent=35 // pred_region
          %324 = dma.done %s316, 1792
        $region48: #{tpu_custom_call.1} parent=35 // pred_fallthru
          _
        %s325 = sand.u32 %s131, 1
        %s326 = scalar_lea.sflag [#allocation9], %s325
        %s327 = sand.u32 %s131, 1
        %s328 = smul.addr %s327, 28
        %s329 = scalar_lea.vmem [#allocation8], %s328
        // Predicated region
        $region49: #{tpu_custom_call.1} parent=35 // pred_check
          %p330 = pneg %p144
        $region50: #{tpu_custom_call.1} parent=35 // pred_check_branch
          %332 = sbr.rel (%p330) target = $region52
        $region51: #{tpu_custom_call.1} parent=35 // pred_region
          %334 = dma.done %s326, 448
        $region52: #{tpu_custom_call.1} parent=35 // pred_fallthru
          _
        %s335 = sand.u32 %s49, 1
        %s336 = scalar_lea.sflag [#allocation3], %s335
        %s337 = sand.u32 %s49, 1
        %s338 = smul.addr %s337, 112
        %s339 = scalar_lea.vmem [#allocation2], %s338
        %p340 = pneg %p62
        %p341 = pneg %p59
        %s342 = sand.u32 %s27, 1
        %s343 = scalar_lea.sflag [#allocation6], %s342
        %s344 = sand.u32 %s77, 1
        %s345 = smul.addr %s344, 112
        %s346 = scalar_lea.vmem [#allocation5], %s345
        %p347 = pneg %p90
        %p348 = pneg %p87
        %s349 = sand.u32 %s27, 1
        %s350 = scalar_lea.sflag [#allocation6], %s349
        %s351 = sand.u32 %s105, 1
        %s352 = smul.addr %s351, 112
        %s353 = scalar_lea.vmem [#allocation7], %s352
        %p354 = pneg %p118
        %p355 = pneg %p115
        %s356 = sand.u32 %s131, 1
        %s357 = scalar_lea.sflag [#allocation9], %s356
        %s358 = sand.u32 %s131, 1
        %s359 = smul.addr %s358, 28
        %s360 = scalar_lea.vmem [#allocation8], %s359
        %p361 = pneg %p144
        %p362 = pneg %p141
        %p363 = pneg %p172
        %p364 = pneg %p169
        %s365 = sand.u32 %s159, 1
        %s366 = scalar_lea.sflag [#allocation4], %s365
        %s367 = sand.u32 %s159, 1
        %s368 = smul.addr %s367, 224
        %s369 = scalar_lea.vmem [#allocation10], %s368
        %s370 = smul.u32 4, %s32
        %s371 = smul.u32 4, %s32
        %s372 = smul.u32 4, %s32
        %s373 = smul.u32 4, %s32
        %v375 = vld [vmem:[%s299] sm:$0xf]
        %v376 = vld [vmem:[%s299 + $0x4] sm:$0xf]
        %v377 = vld [vmem:[%s299 + $0x8] sm:$0xf]
        %v378 = vld [vmem:[%s299 + $0xc] sm:$0xf]
        %v379 = vld [vmem:[%s299 + $0x10] sm:$0xf]
        %v380 = vld [vmem:[%s299 + $0x14] sm:$0xf]
        %v381 = vld [vmem:[%s299 + $0x18] sm:$0xf]
        %v382 = vld [vmem:[%s299 + $0x1c] sm:$0xf]
        %v383 = vld [vmem:[%s299 + $0x20] sm:$0xf]
        %v384 = vld [vmem:[%s299 + $0x24] sm:$0xf]
        %v385 = vld [vmem:[%s299 + $0x28] sm:$0xf]
        %v386 = vld [vmem:[%s299 + $0x2c] sm:$0xf]
        %v387 = vld [vmem:[%s299 + $0x30] sm:$0xf]
        %v388 = vld [vmem:[%s299 + $0x34] sm:$0xf]
        %v389 = vld [vmem:[%s299 + $0x38] sm:$0xf]
        %v390 = vld [vmem:[%s299 + $0x3c] sm:$0xf]
        %v391 = vld [vmem:[%s299 + $0x40] sm:$0xf]
        %v392 = vld [vmem:[%s299 + $0x44] sm:$0xf]
        %v393 = vld [vmem:[%s299 + $0x48] sm:$0xf]
        %v394 = vld [vmem:[%s299 + $0x4c] sm:$0xf]
        %v395 = vld [vmem:[%s299 + $0x50] sm:$0xf]
        %v396 = vld [vmem:[%s299 + $0x54] sm:$0xf]
        %v397 = vld [vmem:[%s299 + $0x58] sm:$0xf]
        %v398 = vld [vmem:[%s299 + $0x5c] sm:$0xf]
        %v399 = vld [vmem:[%s299 + $0x60] sm:$0xf]
        %v400 = vld [vmem:[%s299 + $0x64] sm:$0xf]
        %v401 = vld [vmem:[%s299 + $0x68] sm:$0xf]
        %v402 = vld [vmem:[%s299 + $0x6c] sm:$0xf]
        %v403 = vld [vmem:[%s309] sm:$0xf]
        %v404 = vld [vmem:[%s309 + $0x4] sm:$0xf]
        %v405 = vld [vmem:[%s309 + $0x8] sm:$0xf]
        %v406 = vld [vmem:[%s309 + $0xc] sm:$0xf]
        %v407 = vld [vmem:[%s309 + $0x10] sm:$0xf]
        %v408 = vld [vmem:[%s309 + $0x14] sm:$0xf]
        %v409 = vld [vmem:[%s309 + $0x18] sm:$0xf]
        %v410 = vld [vmem:[%s309 + $0x1c] sm:$0xf]
        %v411 = vld [vmem:[%s309 + $0x20] sm:$0xf]
        %v412 = vld [vmem:[%s309 + $0x24] sm:$0xf]
        %v413 = vld [vmem:[%s309 + $0x28] sm:$0xf]
        %v414 = vld [vmem:[%s309 + $0x2c] sm:$0xf]
        %v415 = vld [vmem:[%s309 + $0x30] sm:$0xf]
        %v416 = vld [vmem:[%s309 + $0x34] sm:$0xf]
        %v417 = vld [vmem:[%s309 + $0x38] sm:$0xf]
        %v418 = vld [vmem:[%s309 + $0x3c] sm:$0xf]
        %v419 = vld [vmem:[%s309 + $0x40] sm:$0xf]
        %v420 = vld [vmem:[%s309 + $0x44] sm:$0xf]
        %v421 = vld [vmem:[%s309 + $0x48] sm:$0xf]
        %v422 = vld [vmem:[%s309 + $0x4c] sm:$0xf]
        %v423 = vld [vmem:[%s309 + $0x50] sm:$0xf]
        %v424 = vld [vmem:[%s309 + $0x54] sm:$0xf]
        %v425 = vld [vmem:[%s309 + $0x58] sm:$0xf]
        %v426 = vld [vmem:[%s309 + $0x5c] sm:$0xf]
        %v427 = vld [vmem:[%s309 + $0x60] sm:$0xf]
        %v428 = vld [vmem:[%s309 + $0x64] sm:$0xf]
        %v429 = vld [vmem:[%s309 + $0x68] sm:$0xf]
        %v430 = vld [vmem:[%s309 + $0x6c] sm:$0xf]
        %v431 = vld [vmem:[%s319] sm:$0xf]
        %v432 = vld [vmem:[%s319 + $0x4] sm:$0xf]
        %v433 = vld [vmem:[%s319 + $0x8] sm:$0xf]
        %v434 = vld [vmem:[%s319 + $0xc] sm:$0xf]
        %v435 = vld [vmem:[%s319 + $0x10] sm:$0xf]
        %v436 = vld [vmem:[%s319 + $0x14] sm:$0xf]
        %v437 = vld [vmem:[%s319 + $0x18] sm:$0xf]
        %v438 = vld [vmem:[%s319 + $0x1c] sm:$0xf]
        %v439 = vld [vmem:[%s319 + $0x20] sm:$0xf]
        %v440 = vld [vmem:[%s319 + $0x24] sm:$0xf]
        %v441 = vld [vmem:[%s319 + $0x28] sm:$0xf]
        %v442 = vld [vmem:[%s319 + $0x2c] sm:$0xf]
        %v443 = vld [vmem:[%s319 + $0x30] sm:$0xf]
        %v444 = vld [vmem:[%s319 + $0x34] sm:$0xf]
        %v445 = vld [vmem:[%s319 + $0x38] sm:$0xf]
        %v446 = vld [vmem:[%s319 + $0x3c] sm:$0xf]
        %v447 = vld [vmem:[%s319 + $0x40] sm:$0xf]
        %v448 = vld [vmem:[%s319 + $0x44] sm:$0xf]
        %v449 = vld [vmem:[%s319 + $0x48] sm:$0xf]
        %v450 = vld [vmem:[%s319 + $0x4c] sm:$0xf]
        %v451 = vld [vmem:[%s319 + $0x50] sm:$0xf]
        %v452 = vld [vmem:[%s319 + $0x54] sm:$0xf]
        %v453 = vld [vmem:[%s319 + $0x58] sm:$0xf]
        %v454 = vld [vmem:[%s319 + $0x5c] sm:$0xf]
        %v455 = vld [vmem:[%s319 + $0x60] sm:$0xf]
        %v456 = vld [vmem:[%s319 + $0x64] sm:$0xf]
        %v457 = vld [vmem:[%s319 + $0x68] sm:$0xf]
        %v458 = vld [vmem:[%s319 + $0x6c] sm:$0xf]
        %v459 = vld [vmem:[%s329] sm:$0xf]
        %v460 = vld [vmem:[%s329 + $0x4] sm:$0xf]
        %v461 = vld [vmem:[%s329 + $0x8] sm:$0xf]
        %v462 = vld [vmem:[%s329 + $0xc] sm:$0xf]
        %v463 = vld [vmem:[%s329 + $0x10] sm:$0xf]
        %v464 = vld [vmem:[%s329 + $0x14] sm:$0xf]
        %v465 = vld [vmem:[%s329 + $0x18] sm:$0xf]
        %v466 = vunpack.c.l.bf16 %v459
        %v467 = vunpack.c.l.bf16 %v460
        %v468 = vunpack.c.l.bf16 %v461
        %v469 = vunpack.c.l.bf16 %v462
        %v470 = vunpack.c.l.bf16 %v463
        %v471 = vunpack.c.l.bf16 %v464
        %v472 = vunpack.c.l.bf16 %v465
        %v480 = vunpack.c.l.b16 %v375
        %v481 = vunpack.c.l.b16 %v376
        %v482 = vunpack.c.l.b16 %v377
        %v483 = vunpack.c.l.b16 %v378
        %v484 = vunpack.c.l.b16 %v379
        %v485 = vunpack.c.l.b16 %v380
        %v486 = vunpack.c.l.b16 %v381
        %v487 = vpack.c.b16 %v481, %v480
        %v488 = vpack.c.b16 %v483, %v482
        %v489 = vpack.c.b16 %v485, %v484
        %v490 = vpack.c.b16 %v486, %v486
        %v498 = vunpack.c.l.b16 %v403
        %v499 = vunpack.c.l.b16 %v404
        %v500 = vunpack.c.l.b16 %v405
        %v501 = vunpack.c.l.b16 %v406
        %v502 = vunpack.c.l.b16 %v407
        %v503 = vunpack.c.l.b16 %v408
        %v504 = vunpack.c.l.b16 %v409
        %v505 = vpack.c.b16 %v499, %v498
        %v506 = vpack.c.b16 %v501, %v500
        %v507 = vpack.c.b16 %v503, %v502
        %v508 = vpack.c.b16 %v504, %v504
        %vm509 = vcmask 457728
        %v511 = vsel %vm509, %v487, 0
        %v514 = vsel %vm509, %v488, 0
        %v517 = vsel %vm509, %v489, 0
        %v520 = vsel %vm509, %v490, 0
        %v523 = vsel %vm509, %v505, 0
        %v526 = vsel %vm509, %v506, 0
        %v529 = vsel %vm509, %v507, 0
        %v532 = vsel %vm509, %v508, 0
        %534 = vmatpush.bf16.xpose.msra.mxu0 0
        %535 = vmatpush.bf16.xpose.msra.mxu0 0
        %536 = vmatpush.bf16.xpose.msra.mxu0 0
        %537 = vmatpush.bf16.xpose.msra.mxu0 0
        %538 = vmatpush.bf16.xpose.msra.mxu0 %v532
        %539 = vmatpush.bf16.xpose.msra.mxu0 %v529
        %540 = vmatpush.bf16.xpose.msra.mxu0 %v526
        %541 = vmatpush.bf16.xpose.msra.mxu0 %v523
        %542 = vmatmul.bf16.gmra.mxu0 %v511
        %v543 = vpop.f32.mrf.mxu0
        %v544 = vadd.f32 %v466, %v543
        %v545 = vpop.f32.mrf.mxu0
        %v546 = vadd.f32 %v467, %v545
        %547 = vmatmul.bf16.gmra.mxu0 %v514
        %v548 = vpop.f32.mrf.mxu0
        %v549 = vadd.f32 %v468, %v548
        %v550 = vpop.f32.mrf.mxu0
        %v551 = vadd.f32 %v469, %v550
        %552 = vmatmul.bf16.gmra.mxu0 %v517
        %v553 = vpop.f32.mrf.mxu0
        %v554 = vadd.f32 %v470, %v553
        %v555 = vpop.f32.mrf.mxu0
        %v556 = vadd.f32 %v471, %v555
        %557 = vmatmul.bf16.gmra.mxu0 %v520
        %v558 = vpop.f32.mrf.mxu0
        %v559 = vadd.f32 %v472, %v558
        %v560 = vpop.f32.mrf.mxu0
        %561 = vdwg.mxu0
        %v569 = vunpack.c.l.b16 %v382
        %v570 = vunpack.c.l.b16 %v383
        %v571 = vunpack.c.l.b16 %v384
        %v572 = vunpack.c.l.b16 %v385
        %v573 = vunpack.c.l.b16 %v386
        %v574 = vunpack.c.l.b16 %v387
        %v575 = vunpack.c.l.b16 %v388
        %v576 = vpack.c.b16 %v570, %v569
        %v577 = vpack.c.b16 %v572, %v571
        %v578 = vpack.c.b16 %v574, %v573
        %v579 = vpack.c.b16 %v575, %v575
        %v587 = vunpack.c.l.b16 %v410
        %v588 = vunpack.c.l.b16 %v411
        %v589 = vunpack.c.l.b16 %v412
        %v590 = vunpack.c.l.b16 %v413
        %v591 = vunpack.c.l.b16 %v414
        %v592 = vunpack.c.l.b16 %v415
        %v593 = vunpack.c.l.b16 %v416
        %v594 = vpack.c.b16 %v588, %v587
        %v595 = vpack.c.b16 %v590, %v589
        %v596 = vpack.c.b16 %v592, %v591
        %v597 = vpack.c.b16 %v593, %v593
        %v599 = vsel %vm509, %v576, 0
        %v602 = vsel %vm509, %v577, 0
        %v605 = vsel %vm509, %v578, 0
        %v608 = vsel %vm509, %v579, 0
        %v611 = vsel %vm509, %v594, 0
        %v614 = vsel %vm509, %v595, 0
        %v617 = vsel %vm509, %v596, 0
        %v620 = vsel %vm509, %v597, 0
        %622 = vmatpush.bf16.xpose.msra.mxu0 0
        %623 = vmatpush.bf16.xpose.msra.mxu0 0
        %624 = vmatpush.bf16.xpose.msra.mxu0 0
        %625 = vmatpush.bf16.xpose.msra.mxu0 0
        %626 = vmatpush.bf16.xpose.msra.mxu0 %v620
        %627 = vmatpush.bf16.xpose.msra.mxu0 %v617
        %628 = vmatpush.bf16.xpose.msra.mxu0 %v614
        %629 = vmatpush.bf16.xpose.msra.mxu0 %v611
        %630 = vmatmul.bf16.gmra.mxu0 %v599
        %v631 = vpop.f32.mrf.mxu0
        %v632 = vadd.f32 %v466, %v631
        %v633 = vpop.f32.mrf.mxu0
        %v634 = vadd.f32 %v467, %v633
        %635 = vmatmul.bf16.gmra.mxu0 %v602
        %v636 = vpop.f32.mrf.mxu0
        %v637 = vadd.f32 %v468, %v636
        %v638 = vpop.f32.mrf.mxu0
        %v639 = vadd.f32 %v469, %v638
        %640 = vmatmul.bf16.gmra.mxu0 %v605
        %v641 = vpop.f32.mrf.mxu0
        %v642 = vadd.f32 %v470, %v641
        %v643 = vpop.f32.mrf.mxu0
        %v644 = vadd.f32 %v471, %v643
        %645 = vmatmul.bf16.gmra.mxu0 %v608
        %v646 = vpop.f32.mrf.mxu0
        %v647 = vadd.f32 %v472, %v646
        %v648 = vpop.f32.mrf.mxu0
        %649 = vdwg.mxu0
        %v657 = vunpack.c.l.b16 %v389
        %v658 = vunpack.c.l.b16 %v390
        %v659 = vunpack.c.l.b16 %v391
        %v660 = vunpack.c.l.b16 %v392
        %v661 = vunpack.c.l.b16 %v393
        %v662 = vunpack.c.l.b16 %v394
        %v663 = vunpack.c.l.b16 %v395
        %v664 = vpack.c.b16 %v658, %v657
        %v665 = vpack.c.b16 %v660, %v659
        %v666 = vpack.c.b16 %v662, %v661
        %v667 = vpack.c.b16 %v663, %v663
        %v675 = vunpack.c.l.b16 %v417
        %v676 = vunpack.c.l.b16 %v418
        %v677 = vunpack.c.l.b16 %v419
        %v678 = vunpack.c.l.b16 %v420
        %v679 = vunpack.c.l.b16 %v421
        %v680 = vunpack.c.l.b16 %v422
        %v681 = vunpack.c.l.b16 %v423
        %v682 = vpack.c.b16 %v676, %v675
        %v683 = vpack.c.b16 %v678, %v677
        %v684 = vpack.c.b16 %v680, %v679
        %v685 = vpack.c.b16 %v681, %v681
        %v687 = vsel %vm509, %v664, 0
        %v690 = vsel %vm509, %v665, 0
        %v693 = vsel %vm509, %v666, 0
        %v696 = vsel %vm509, %v667, 0
        %v699 = vsel %vm509, %v682, 0
        %v702 = vsel %vm509, %v683, 0
        %v705 = vsel %vm509, %v684, 0
        %v708 = vsel %vm509, %v685, 0
        %710 = vmatpush.bf16.xpose.msra.mxu0 0
        %711 = vmatpush.bf16.xpose.msra.mxu0 0
        %712 = vmatpush.bf16.xpose.msra.mxu0 0
        %713 = vmatpush.bf16.xpose.msra.mxu0 0
        %714 = vmatpush.bf16.xpose.msra.mxu0 %v708
        %715 = vmatpush.bf16.xpose.msra.mxu0 %v705
        %716 = vmatpush.bf16.xpose.msra.mxu0 %v702
        %717 = vmatpush.bf16.xpose.msra.mxu0 %v699
        %718 = vmatmul.bf16.gmra.mxu0 %v687
        %v719 = vpop.f32.mrf.mxu0
        %v720 = vadd.f32 %v466, %v719
        %v721 = vpop.f32.mrf.mxu0
        %v722 = vadd.f32 %v467, %v721
        %723 = vmatmul.bf16.gmra.mxu0 %v690
        %v724 = vpop.f32.mrf.mxu0
        %v725 = vadd.f32 %v468, %v724
        %v726 = vpop.f32.mrf.mxu0
        %v727 = vadd.f32 %v469, %v726
        %728 = vmatmul.bf16.gmra.mxu0 %v693
        %v729 = vpop.f32.mrf.mxu0
        %v730 = vadd.f32 %v470, %v729
        %v731 = vpop.f32.mrf.mxu0
        %v732 = vadd.f32 %v471, %v731
        %733 = vmatmul.bf16.gmra.mxu0 %v696
        %v734 = vpop.f32.mrf.mxu0
        %v735 = vadd.f32 %v472, %v734
        %v736 = vpop.f32.mrf.mxu0
        %737 = vdwg.mxu0
        %v745 = vunpack.c.l.b16 %v396
        %v746 = vunpack.c.l.b16 %v397
        %v747 = vunpack.c.l.b16 %v398
        %v748 = vunpack.c.l.b16 %v399
        %v749 = vunpack.c.l.b16 %v400
        %v750 = vunpack.c.l.b16 %v401
        %v751 = vunpack.c.l.b16 %v402
        %v752 = vpack.c.b16 %v746, %v745
        %v753 = vpack.c.b16 %v748, %v747
        %v754 = vpack.c.b16 %v750, %v749
        %v755 = vpack.c.b16 %v751, %v751
        %v763 = vunpack.c.l.b16 %v424
        %v764 = vunpack.c.l.b16 %v425
        %v765 = vunpack.c.l.b16 %v426
        %v766 = vunpack.c.l.b16 %v427
        %v767 = vunpack.c.l.b16 %v428
        %v768 = vunpack.c.l.b16 %v429
        %v769 = vunpack.c.l.b16 %v430
        %v770 = vpack.c.b16 %v764, %v763
        %v771 = vpack.c.b16 %v766, %v765
        %v772 = vpack.c.b16 %v768, %v767
        %v773 = vpack.c.b16 %v769, %v769
        %v775 = vsel %vm509, %v752, 0
        %v778 = vsel %vm509, %v753, 0
        %v781 = vsel %vm509, %v754, 0
        %v784 = vsel %vm509, %v755, 0
        %v787 = vsel %vm509, %v770, 0
        %v790 = vsel %vm509, %v771, 0
        %v793 = vsel %vm509, %v772, 0
        %v796 = vsel %vm509, %v773, 0
        %798 = vmatpush.bf16.xpose.msra.mxu0 0
        %799 = vmatpush.bf16.xpose.msra.mxu0 0
        %800 = vmatpush.bf16.xpose.msra.mxu0 0
        %801 = vmatpush.bf16.xpose.msra.mxu0 0
        %802 = vmatpush.bf16.xpose.msra.mxu0 %v796
        %803 = vmatpush.bf16.xpose.msra.mxu0 %v793
        %804 = vmatpush.bf16.xpose.msra.mxu0 %v790
        %805 = vmatpush.bf16.xpose.msra.mxu0 %v787
        %806 = vmatmul.bf16.gmra.mxu0 %v775
        %v807 = vpop.f32.mrf.mxu0
        %v808 = vadd.f32 %v466, %v807
        %v809 = vpop.f32.mrf.mxu0
        %v810 = vadd.f32 %v467, %v809
        %811 = vmatmul.bf16.gmra.mxu0 %v778
        %v812 = vpop.f32.mrf.mxu0
        %v813 = vadd.f32 %v468, %v812
        %v814 = vpop.f32.mrf.mxu0
        %v815 = vadd.f32 %v469, %v814
        %816 = vmatmul.bf16.gmra.mxu0 %v781
        %v817 = vpop.f32.mrf.mxu0
        %v818 = vadd.f32 %v470, %v817
        %v819 = vpop.f32.mrf.mxu0
        %v820 = vadd.f32 %v471, %v819
        %821 = vmatmul.bf16.gmra.mxu0 %v784
        %v822 = vpop.f32.mrf.mxu0
        %v823 = vadd.f32 %v472, %v822
        %v824 = vpop.f32.mrf.mxu0
        %825 = vdwg.mxu0
        %v826 = vsel %vm509, %v544, -inf
        %827 = vmax.xlane.f32.xlu0 %v826
        %v828 = vpop.xlane.xlu0 %827
        %v829 = vsel %vm509, %v546, -inf
        %830 = vmax.xlane.f32.xlu0 %v829
        %v831 = vpop.xlane.xlu0 %830
        %v832 = vsel %vm509, %v549, -inf
        %833 = vmax.xlane.f32.xlu0 %v832
        %v834 = vpop.xlane.xlu0 %833
        %v835 = vsel %vm509, %v551, -inf
        %836 = vmax.xlane.f32.xlu0 %v835
        %v837 = vpop.xlane.xlu0 %836
        %v838 = vsel %vm509, %v554, -inf
        %839 = vmax.xlane.f32.xlu0 %v838
        %v840 = vpop.xlane.xlu0 %839
        %v841 = vsel %vm509, %v556, -inf
        %842 = vmax.xlane.f32.xlu0 %v841
        %v843 = vpop.xlane.xlu0 %842
        %v844 = vsel %vm509, %v559, -inf
        %845 = vmax.xlane.f32.xlu0 %v844
        %v846 = vpop.xlane.xlu0 %845
        %v847 = vsel %vm509, %v632, -inf
        %848 = vmax.xlane.f32.xlu0 %v847
        %v849 = vpop.xlane.xlu0 %848
        %v850 = vsel %vm509, %v634, -inf
        %851 = vmax.xlane.f32.xlu0 %v850
        %v852 = vpop.xlane.xlu0 %851
        %v853 = vsel %vm509, %v637, -inf
        %854 = vmax.xlane.f32.xlu0 %v853
        %v855 = vpop.xlane.xlu0 %854
        %v856 = vsel %vm509, %v639, -inf
        %857 = vmax.xlane.f32.xlu0 %v856
        %v858 = vpop.xlane.xlu0 %857
        %v859 = vsel %vm509, %v642, -inf
        %860 = vmax.xlane.f32.xlu0 %v859
        %v861 = vpop.xlane.xlu0 %860
        %v862 = vsel %vm509, %v644, -inf
        %863 = vmax.xlane.f32.xlu0 %v862
        %v864 = vpop.xlane.xlu0 %863
        %v865 = vsel %vm509, %v647, -inf
        %866 = vmax.xlane.f32.xlu0 %v865
        %v867 = vpop.xlane.xlu0 %866
        %v868 = vsel %vm509, %v720, -inf
        %869 = vmax.xlane.f32.xlu0 %v868
        %v870 = vpop.xlane.xlu0 %869
        %v871 = vsel %vm509, %v722, -inf
        %872 = vmax.xlane.f32.xlu0 %v871
        %v873 = vpop.xlane.xlu0 %872
        %v874 = vsel %vm509, %v725, -inf
        %875 = vmax.xlane.f32.xlu0 %v874
        %v876 = vpop.xlane.xlu0 %875
        %v877 = vsel %vm509, %v727, -inf
        %878 = vmax.xlane.f32.xlu0 %v877
        %v879 = vpop.xlane.xlu0 %878
        %v880 = vsel %vm509, %v730, -inf
        %881 = vmax.xlane.f32.xlu0 %v880
        %v882 = vpop.xlane.xlu0 %881
        %v883 = vsel %vm509, %v732, -inf
        %884 = vmax.xlane.f32.xlu0 %v883
        %v885 = vpop.xlane.xlu0 %884
        %v886 = vsel %vm509, %v735, -inf
        %887 = vmax.xlane.f32.xlu0 %v886
        %v888 = vpop.xlane.xlu0 %887
        %v889 = vsel %vm509, %v808, -inf
        %890 = vmax.xlane.f32.xlu0 %v889
        %v891 = vpop.xlane.xlu0 %890
        %v892 = vsel %vm509, %v810, -inf
        %893 = vmax.xlane.f32.xlu0 %v892
        %v894 = vpop.xlane.xlu0 %893
        %v895 = vsel %vm509, %v813, -inf
        %896 = vmax.xlane.f32.xlu0 %v895
        %v897 = vpop.xlane.xlu0 %896
        %v898 = vsel %vm509, %v815, -inf
        %899 = vmax.xlane.f32.xlu0 %v898
        %v900 = vpop.xlane.xlu0 %899
        %v901 = vsel %vm509, %v818, -inf
        %902 = vmax.xlane.f32.xlu0 %v901
        %v903 = vpop.xlane.xlu0 %902
        %v904 = vsel %vm509, %v820, -inf
        %905 = vmax.xlane.f32.xlu0 %v904
        %v906 = vpop.xlane.xlu0 %905
        %v907 = vsel %vm509, %v823, -inf
        %908 = vmax.xlane.f32.xlu0 %v907
        %v909 = vpop.xlane.xlu0 %908
        %v910 = vsub.f32 %v544, %v828
        %v911 = vsub.f32 %v546, %v831
        %v912 = vsub.f32 %v549, %v834
        %v913 = vsub.f32 %v551, %v837
        %v914 = vsub.f32 %v554, %v840
        %v915 = vsub.f32 %v556, %v843
        %v916 = vsub.f32 %v559, %v846
        %v917 = vsub.f32 %v632, %v849
        %v918 = vsub.f32 %v634, %v852
        %v919 = vsub.f32 %v637, %v855
        %v920 = vsub.f32 %v639, %v858
        %v921 = vsub.f32 %v642, %v861
        %v922 = vsub.f32 %v644, %v864
        %v923 = vsub.f32 %v647, %v867
        %v924 = vsub.f32 %v720, %v870
        %v925 = vsub.f32 %v722, %v873
        %v926 = vsub.f32 %v725, %v876
        %v927 = vsub.f32 %v727, %v879
        %v928 = vsub.f32 %v730, %v882
        %v929 = vsub.f32 %v732, %v885
        %v930 = vsub.f32 %v735, %v888
        %v931 = vsub.f32 %v808, %v891
        %v932 = vsub.f32 %v810, %v894
        %v933 = vsub.f32 %v813, %v897
        %v934 = vsub.f32 %v815, %v900
        %v935 = vsub.f32 %v818, %v903
        %v936 = vsub.f32 %v820, %v906
        %v937 = vsub.f32 %v823, %v909
        %v938 = vmul.f32 %v910, 1.442695
        %v939 = vpow.pop %v938
        %v940 = vmul.f32 %v911, 1.442695
        %v941 = vpow.pop %v940
        %v942 = vmul.f32 %v912, 1.442695
        %v943 = vpow.pop %v942
        %v944 = vmul.f32 %v913, 1.442695
        %v945 = vpow.pop %v944
        %v946 = vmul.f32 %v914, 1.442695
        %v947 = vpow.pop %v946
        %v948 = vmul.f32 %v915, 1.442695
        %v949 = vpow.pop %v948
        %v950 = vmul.f32 %v916, 1.442695
        %v951 = vpow.pop %v950
        %v952 = vmul.f32 %v917, 1.442695
        %v953 = vpow.pop %v952
        %v954 = vmul.f32 %v918, 1.442695
        %v955 = vpow.pop %v954
        %v956 = vmul.f32 %v919, 1.442695
        %v957 = vpow.pop %v956
        %v958 = vmul.f32 %v920, 1.442695
        %v959 = vpow.pop %v958
        %v960 = vmul.f32 %v921, 1.442695
        %v961 = vpow.pop %v960
        %v962 = vmul.f32 %v922, 1.442695
        %v963 = vpow.pop %v962
        %v964 = vmul.f32 %v923, 1.442695
        %v965 = vpow.pop %v964
        %v966 = vmul.f32 %v924, 1.442695
        %v967 = vpow.pop %v966
        %v968 = vmul.f32 %v925, 1.442695
        %v969 = vpow.pop %v968
        %v970 = vmul.f32 %v926, 1.442695
        %v971 = vpow.pop %v970
        %v972 = vmul.f32 %v927, 1.442695
        %v973 = vpow.pop %v972
        %v974 = vmul.f32 %v928, 1.442695
        %v975 = vpow.pop %v974
        %v976 = vmul.f32 %v929, 1.442695
        %v977 = vpow.pop %v976
        %v978 = vmul.f32 %v930, 1.442695
        %v979 = vpow.pop %v978
        %v980 = vmul.f32 %v931, 1.442695
        %v981 = vpow.pop %v980
        %v982 = vmul.f32 %v932, 1.442695
        %v983 = vpow.pop %v982
        %v984 = vmul.f32 %v933, 1.442695
        %v985 = vpow.pop %v984
        %v986 = vmul.f32 %v934, 1.442695
        %v987 = vpow.pop %v986
        %v988 = vmul.f32 %v935, 1.442695
        %v989 = vpow.pop %v988
        %v990 = vmul.f32 %v936, 1.442695
        %v991 = vpow.pop %v990
        %v992 = vmul.f32 %v937, 1.442695
        %v993 = vpow.pop %v992
        %v994 = vsel %vm509, %v939, 0.0
        %995 = vadd.xlane.f32.xlu0 %v994
        %v996 = vpop.xlane.xlu0 %995
        %v997 = vsel %vm509, %v941, 0.0
        %998 = vadd.xlane.f32.xlu0 %v997
        %v999 = vpop.xlane.xlu0 %998
        %v1000 = vsel %vm509, %v943, 0.0
        %1001 = vadd.xlane.f32.xlu0 %v1000
        %v1002 = vpop.xlane.xlu0 %1001
        %v1003 = vsel %vm509, %v945, 0.0
        %1004 = vadd.xlane.f32.xlu0 %v1003
        %v1005 = vpop.xlane.xlu0 %1004
        %v1006 = vsel %vm509, %v947, 0.0
        %1007 = vadd.xlane.f32.xlu0 %v1006
        %v1008 = vpop.xlane.xlu0 %1007
        %v1009 = vsel %vm509, %v949, 0.0
        %1010 = vadd.xlane.f32.xlu0 %v1009
        %v1011 = vpop.xlane.xlu0 %1010
        %v1012 = vsel %vm509, %v951, 0.0
        %1013 = vadd.xlane.f32.xlu0 %v1012
        %v1014 = vpop.xlane.xlu0 %1013
        %v1015 = vsel %vm509, %v953, 0.0
        %1016 = vadd.xlane.f32.xlu0 %v1015
        %v1017 = vpop.xlane.xlu0 %1016
        %v1018 = vsel %vm509, %v955, 0.0
        %1019 = vadd.xlane.f32.xlu0 %v1018
        %v1020 = vpop.xlane.xlu0 %1019
        %v1021 = vsel %vm509, %v957, 0.0
        %1022 = vadd.xlane.f32.xlu0 %v1021
        %v1023 = vpop.xlane.xlu0 %1022
        %v1024 = vsel %vm509, %v959, 0.0
        %1025 = vadd.xlane.f32.xlu0 %v1024
        %v1026 = vpop.xlane.xlu0 %1025
        %v1027 = vsel %vm509, %v961, 0.0
        %1028 = vadd.xlane.f32.xlu0 %v1027
        %v1029 = vpop.xlane.xlu0 %1028
        %v1030 = vsel %vm509, %v963, 0.0
        %1031 = vadd.xlane.f32.xlu0 %v1030
        %v1032 = vpop.xlane.xlu0 %1031
        %v1033 = vsel %vm509, %v965, 0.0
        %1034 = vadd.xlane.f32.xlu0 %v1033
        %v1035 = vpop.xlane.xlu0 %1034
        %v1036 = vsel %vm509, %v967, 0.0
        %1037 = vadd.xlane.f32.xlu0 %v1036
        %v1038 = vpop.xlane.xlu0 %1037
        %v1039 = vsel %vm509, %v969, 0.0
        %1040 = vadd.xlane.f32.xlu0 %v1039
        %v1041 = vpop.xlane.xlu0 %1040
        %v1042 = vsel %vm509, %v971, 0.0
        %1043 = vadd.xlane.f32.xlu0 %v1042
        %v1044 = vpop.xlane.xlu0 %1043
        %v1045 = vsel %vm509, %v973, 0.0
        %1046 = vadd.xlane.f32.xlu0 %v1045
        %v1047 = vpop.xlane.xlu0 %1046
        %v1048 = vsel %vm509, %v975, 0.0
        %1049 = vadd.xlane.f32.xlu0 %v1048
        %v1050 = vpop.xlane.xlu0 %1049
        %v1051 = vsel %vm509, %v977, 0.0
        %1052 = vadd.xlane.f32.xlu0 %v1051
        %v1053 = vpop.xlane.xlu0 %1052
        %v1054 = vsel %vm509, %v979, 0.0
        %1055 = vadd.xlane.f32.xlu0 %v1054
        %v1056 = vpop.xlane.xlu0 %1055
        %v1057 = vsel %vm509, %v981, 0.0
        %1058 = vadd.xlane.f32.xlu0 %v1057
        %v1059 = vpop.xlane.xlu0 %1058
        %v1060 = vsel %vm509, %v983, 0.0
        %1061 = vadd.xlane.f32.xlu0 %v1060
        %v1062 = vpop.xlane.xlu0 %1061
        %v1063 = vsel %vm509, %v985, 0.0
        %1064 = vadd.xlane.f32.xlu0 %v1063
        %v1065 = vpop.xlane.xlu0 %1064
        %v1066 = vsel %vm509, %v987, 0.0
        %1067 = vadd.xlane.f32.xlu0 %v1066
        %v1068 = vpop.xlane.xlu0 %1067
        %v1069 = vsel %vm509, %v989, 0.0
        %1070 = vadd.xlane.f32.xlu0 %v1069
        %v1071 = vpop.xlane.xlu0 %1070
        %v1072 = vsel %vm509, %v991, 0.0
        %1073 = vadd.xlane.f32.xlu0 %v1072
        %v1074 = vpop.xlane.xlu0 %1073
        %v1075 = vsel %vm509, %v993, 0.0
        %1076 = vadd.xlane.f32.xlu0 %v1075
        %v1077 = vpop.xlane.xlu0 %1076
        %v1078 = vpack.c.bf16 %v939, %v939
        %v1079 = vpack.c.bf16 %v941, %v941
        %v1080 = vpack.c.bf16 %v943, %v943
        %v1081 = vpack.c.bf16 %v945, %v945
        %v1082 = vpack.c.bf16 %v947, %v947
        %v1083 = vpack.c.bf16 %v949, %v949
        %v1084 = vpack.c.bf16 %v951, %v951
        %v1085 = vpack.c.bf16 %v953, %v953
        %v1086 = vpack.c.bf16 %v955, %v955
        %v1087 = vpack.c.bf16 %v957, %v957
        %v1088 = vpack.c.bf16 %v959, %v959
        %v1089 = vpack.c.bf16 %v961, %v961
        %v1090 = vpack.c.bf16 %v963, %v963
        %v1091 = vpack.c.bf16 %v965, %v965
        %v1092 = vpack.c.bf16 %v967, %v967
        %v1093 = vpack.c.bf16 %v969, %v969
        %v1094 = vpack.c.bf16 %v971, %v971
        %v1095 = vpack.c.bf16 %v973, %v973
        %v1096 = vpack.c.bf16 %v975, %v975
        %v1097 = vpack.c.bf16 %v977, %v977
        %v1098 = vpack.c.bf16 %v979, %v979
        %v1099 = vpack.c.bf16 %v981, %v981
        %v1100 = vpack.c.bf16 %v983, %v983
        %v1101 = vpack.c.bf16 %v985, %v985
        %v1102 = vpack.c.bf16 %v987, %v987
        %v1103 = vpack.c.bf16 %v989, %v989
        %v1104 = vpack.c.bf16 %v991, %v991
        %v1105 = vpack.c.bf16 %v993, %v993
        %v1113 = vunpack.c.l.b16 %v1078
        %v1114 = vunpack.c.l.b16 %v1079
        %v1115 = vunpack.c.l.b16 %v1080
        %v1116 = vunpack.c.l.b16 %v1081
        %v1117 = vunpack.c.l.b16 %v1082
        %v1118 = vunpack.c.l.b16 %v1083
        %v1119 = vunpack.c.l.b16 %v1084
        %v1120 = vpack.c.b16 %v1114, %v1113
        %v1121 = vpack.c.b16 %v1116, %v1115
        %v1122 = vpack.c.b16 %v1118, %v1117
        %v1123 = vpack.c.b16 %v1119, %v1119
        %v1131 = vunpack.c.l.b16 %v431
        %v1132 = vunpack.c.l.b16 %v432
        %v1133 = vunpack.c.l.b16 %v433
        %v1134 = vunpack.c.l.b16 %v434
        %v1135 = vunpack.c.l.b16 %v435
        %v1136 = vunpack.c.l.b16 %v436
        %v1137 = vunpack.c.l.b16 %v437
        %v1138 = vpack.c.b16 %v1132, %v1131
        %v1139 = vpack.c.b16 %v1134, %v1133
        %v1140 = vpack.c.b16 %v1136, %v1135
        %v1141 = vpack.c.b16 %v1137, %v1137
        %v1146 = vsel %vm509, %v1120, 0
        %v1149 = vsel %vm509, %v1121, 0
        %v1152 = vsel %vm509, %v1122, 0
        %v1155 = vsel %vm509, %v1123, 0
        %vm1157 = vcmask 1043456
        %v1159 = vsel %vm1157, %v1141, 0
        %1161 = vmatpush.bf16.msra.mxu0 0
        %1162 = vmatpush.bf16.msra.mxu0 0
        %1163 = vmatpush.bf16.msra.mxu0 0
        %1164 = vmatpush.bf16.msra.mxu0 0
        %1165 = vmatpush.bf16.msra.mxu0 %v1159
        %1166 = vmatpush.bf16.msra.mxu0 %v1140
        %1167 = vmatpush.bf16.msra.mxu0 %v1139
        %1168 = vmatpush.bf16.msra.mxu0 %v1138
        %1169 = vmatmul.bf16.gmra.mxu0 %v1146
        %v1170 = vpop.f32.mrf.mxu0
        %v1171 = vadd.f32 0.0, %v1170
        %v1172 = vpop.f32.mrf.mxu0
        %v1173 = vadd.f32 0.0, %v1172
        %1174 = vmatmul.bf16.gmra.mxu0 %v1149
        %v1175 = vpop.f32.mrf.mxu0
        %v1176 = vadd.f32 0.0, %v1175
        %v1177 = vpop.f32.mrf.mxu0
        %v1178 = vadd.f32 0.0, %v1177
        %1179 = vmatmul.bf16.gmra.mxu0 %v1152
        %v1180 = vpop.f32.mrf.mxu0
        %v1181 = vadd.f32 0.0, %v1180
        %v1182 = vpop.f32.mrf.mxu0
        %v1183 = vadd.f32 0.0, %v1182
        %1184 = vmatmul.bf16.gmra.mxu0 %v1155
        %v1185 = vpop.f32.mrf.mxu0
        %v1186 = vadd.f32 0.0, %v1185
        %v1187 = vpop.f32.mrf.mxu0
        %1188 = vdwg.mxu0
        %v1196 = vunpack.c.l.b16 %v1085
        %v1197 = vunpack.c.l.b16 %v1086
        %v1198 = vunpack.c.l.b16 %v1087
        %v1199 = vunpack.c.l.b16 %v1088
        %v1200 = vunpack.c.l.b16 %v1089
        %v1201 = vunpack.c.l.b16 %v1090
        %v1202 = vunpack.c.l.b16 %v1091
        %v1203 = vpack.c.b16 %v1197, %v1196
        %v1204 = vpack.c.b16 %v1199, %v1198
        %v1205 = vpack.c.b16 %v1201, %v1200
        %v1206 = vpack.c.b16 %v1202, %v1202
        %v1214 = vunpack.c.l.b16 %v438
        %v1215 = vunpack.c.l.b16 %v439
        %v1216 = vunpack.c.l.b16 %v440
        %v1217 = vunpack.c.l.b16 %v441
        %v1218 = vunpack.c.l.b16 %v442
        %v1219 = vunpack.c.l.b16 %v443
        %v1220 = vunpack.c.l.b16 %v444
        %v1221 = vpack.c.b16 %v1215, %v1214
        %v1222 = vpack.c.b16 %v1217, %v1216
        %v1223 = vpack.c.b16 %v1219, %v1218
        %v1224 = vpack.c.b16 %v1220, %v1220
        %v1229 = vsel %vm509, %v1203, 0
        %v1232 = vsel %vm509, %v1204, 0
        %v1235 = vsel %vm509, %v1205, 0
        %v1238 = vsel %vm509, %v1206, 0
        %v1241 = vsel %vm1157, %v1224, 0
        %1243 = vmatpush.bf16.msra.mxu0 0
        %1244 = vmatpush.bf16.msra.mxu0 0
        %1245 = vmatpush.bf16.msra.mxu0 0
        %1246 = vmatpush.bf16.msra.mxu0 0
        %1247 = vmatpush.bf16.msra.mxu0 %v1241
        %1248 = vmatpush.bf16.msra.mxu0 %v1223
        %1249 = vmatpush.bf16.msra.mxu0 %v1222
        %1250 = vmatpush.bf16.msra.mxu0 %v1221
        %1251 = vmatmul.bf16.gmra.mxu0 %v1229
        %v1252 = vpop.f32.mrf.mxu0
        %v1253 = vadd.f32 0.0, %v1252
        %v1254 = vpop.f32.mrf.mxu0
        %v1255 = vadd.f32 0.0, %v1254
        %1256 = vmatmul.bf16.gmra.mxu0 %v1232
        %v1257 = vpop.f32.mrf.mxu0
        %v1258 = vadd.f32 0.0, %v1257
        %v1259 = vpop.f32.mrf.mxu0
        %v1260 = vadd.f32 0.0, %v1259
        %1261 = vmatmul.bf16.gmra.mxu0 %v1235
        %v1262 = vpop.f32.mrf.mxu0
        %v1263 = vadd.f32 0.0, %v1262
        %v1264 = vpop.f32.mrf.mxu0
        %v1265 = vadd.f32 0.0, %v1264
        %1266 = vmatmul.bf16.gmra.mxu0 %v1238
        %v1267 = vpop.f32.mrf.mxu0
        %v1268 = vadd.f32 0.0, %v1267
        %v1269 = vpop.f32.mrf.mxu0
        %1270 = vdwg.mxu0
        %v1278 = vunpack.c.l.b16 %v1092
        %v1279 = vunpack.c.l.b16 %v1093
        %v1280 = vunpack.c.l.b16 %v1094
        %v1281 = vunpack.c.l.b16 %v1095
        %v1282 = vunpack.c.l.b16 %v1096
        %v1283 = vunpack.c.l.b16 %v1097
        %v1284 = vunpack.c.l.b16 %v1098
        %v1285 = vpack.c.b16 %v1279, %v1278
        %v1286 = vpack.c.b16 %v1281, %v1280
        %v1287 = vpack.c.b16 %v1283, %v1282
        %v1288 = vpack.c.b16 %v1284, %v1284
        %v1296 = vunpack.c.l.b16 %v445
        %v1297 = vunpack.c.l.b16 %v446
        %v1298 = vunpack.c.l.b16 %v447
        %v1299 = vunpack.c.l.b16 %v448
        %v1300 = vunpack.c.l.b16 %v449
        %v1301 = vunpack.c.l.b16 %v450
        %v1302 = vunpack.c.l.b16 %v451
        %v1303 = vpack.c.b16 %v1297, %v1296
        %v1304 = vpack.c.b16 %v1299, %v1298
        %v1305 = vpack.c.b16 %v1301, %v1300
        %v1306 = vpack.c.b16 %v1302, %v1302
        %v1311 = vsel %vm509, %v1285, 0
        %v1314 = vsel %vm509, %v1286, 0
        %v1317 = vsel %vm509, %v1287, 0
        %v1320 = vsel %vm509, %v1288, 0
        %v1323 = vsel %vm1157, %v1306, 0
        %1325 = vmatpush.bf16.msra.mxu0 0
        %1326 = vmatpush.bf16.msra.mxu0 0
        %1327 = vmatpush.bf16.msra.mxu0 0
        %1328 = vmatpush.bf16.msra.mxu0 0
        %1329 = vmatpush.bf16.msra.mxu0 %v1323
        %1330 = vmatpush.bf16.msra.mxu0 %v1305
        %1331 = vmatpush.bf16.msra.mxu0 %v1304
        %1332 = vmatpush.bf16.msra.mxu0 %v1303
        %1333 = vmatmul.bf16.gmra.mxu0 %v1311
        %v1334 = vpop.f32.mrf.mxu0
        %v1335 = vadd.f32 0.0, %v1334
        %v1336 = vpop.f32.mrf.mxu0
        %v1337 = vadd.f32 0.0, %v1336
        %1338 = vmatmul.bf16.gmra.mxu0 %v1314
        %v1339 = vpop.f32.mrf.mxu0
        %v1340 = vadd.f32 0.0, %v1339
        %v1341 = vpop.f32.mrf.mxu0
        %v1342 = vadd.f32 0.0, %v1341
        %1343 = vmatmul.bf16.gmra.mxu0 %v1317
        %v1344 = vpop.f32.mrf.mxu0
        %v1345 = vadd.f32 0.0, %v1344
        %v1346 = vpop.f32.mrf.mxu0
        %v1347 = vadd.f32 0.0, %v1346
        %1348 = vmatmul.bf16.gmra.mxu0 %v1320
        %v1349 = vpop.f32.mrf.mxu0
        %v1350 = vadd.f32 0.0, %v1349
        %v1351 = vpop.f32.mrf.mxu0
        %1352 = vdwg.mxu0
        %v1360 = vunpack.c.l.b16 %v1099
        %v1361 = vunpack.c.l.b16 %v1100
        %v1362 = vunpack.c.l.b16 %v1101
        %v1363 = vunpack.c.l.b16 %v1102
        %v1364 = vunpack.c.l.b16 %v1103
        %v1365 = vunpack.c.l.b16 %v1104
        %v1366 = vunpack.c.l.b16 %v1105
        %v1367 = vpack.c.b16 %v1361, %v1360
        %v1368 = vpack.c.b16 %v1363, %v1362
        %v1369 = vpack.c.b16 %v1365, %v1364
        %v1370 = vpack.c.b16 %v1366, %v1366
        %v1378 = vunpack.c.l.b16 %v452
        %v1379 = vunpack.c.l.b16 %v453
        %v1380 = vunpack.c.l.b16 %v454
        %v1381 = vunpack.c.l.b16 %v455
        %v1382 = vunpack.c.l.b16 %v456
        %v1383 = vunpack.c.l.b16 %v457
        %v1384 = vunpack.c.l.b16 %v458
        %v1385 = vpack.c.b16 %v1379, %v1378
        %v1386 = vpack.c.b16 %v1381, %v1380
        %v1387 = vpack.c.b16 %v1383, %v1382
        %v1388 = vpack.c.b16 %v1384, %v1384
        %v1393 = vsel %vm509, %v1367, 0
        %v1396 = vsel %vm509, %v1368, 0
        %v1399 = vsel %vm509, %v1369, 0
        %v1402 = vsel %vm509, %v1370, 0
        %v1405 = vsel %vm1157, %v1388, 0
        %1407 = vmatpush.bf16.msra.mxu0 0
        %1408 = vmatpush.bf16.msra.mxu0 0
        %1409 = vmatpush.bf16.msra.mxu0 0
        %1410 = vmatpush.bf16.msra.mxu0 0
        %1411 = vmatpush.bf16.msra.mxu0 %v1405
        %1412 = vmatpush.bf16.msra.mxu0 %v1387
        %1413 = vmatpush.bf16.msra.mxu0 %v1386
        %1414 = vmatpush.bf16.msra.mxu0 %v1385
        %1415 = vmatmul.bf16.gmra.mxu0 %v1393
        %v1416 = vpop.f32.mrf.mxu0
        %v1417 = vadd.f32 0.0, %v1416
        %v1418 = vpop.f32.mrf.mxu0
        %v1419 = vadd.f32 0.0, %v1418
        %1420 = vmatmul.bf16.gmra.mxu0 %v1396
        %v1421 = vpop.f32.mrf.mxu0
        %v1422 = vadd.f32 0.0, %v1421
        %v1423 = vpop.f32.mrf.mxu0
        %v1424 = vadd.f32 0.0, %v1423
        %1425 = vmatmul.bf16.gmra.mxu0 %v1399
        %v1426 = vpop.f32.mrf.mxu0
        %v1427 = vadd.f32 0.0, %v1426
        %v1428 = vpop.f32.mrf.mxu0
        %v1429 = vadd.f32 0.0, %v1428
        %1430 = vmatmul.bf16.gmra.mxu0 %v1402
        %v1431 = vpop.f32.mrf.mxu0
        %v1432 = vadd.f32 0.0, %v1431
        %v1433 = vpop.f32.mrf.mxu0
        %1434 = vdwg.mxu0
        %v1435 = vrcp.pop %v996
        %v1436 = vrcp.pop %v999
        %v1437 = vrcp.pop %v1002
        %v1438 = vrcp.pop %v1005
        %v1439 = vrcp.pop %v1008
        %v1440 = vrcp.pop %v1011
        %v1441 = vrcp.pop %v1014
        %v1442 = vrcp.pop %v1017
        %v1443 = vrcp.pop %v1020
        %v1444 = vrcp.pop %v1023
        %v1445 = vrcp.pop %v1026
        %v1446 = vrcp.pop %v1029
        %v1447 = vrcp.pop %v1032
        %v1448 = vrcp.pop %v1035
        %v1449 = vrcp.pop %v1038
        %v1450 = vrcp.pop %v1041
        %v1451 = vrcp.pop %v1044
        %v1452 = vrcp.pop %v1047
        %v1453 = vrcp.pop %v1050
        %v1454 = vrcp.pop %v1053
        %v1455 = vrcp.pop %v1056
        %v1456 = vrcp.pop %v1059
        %v1457 = vrcp.pop %v1062
        %v1458 = vrcp.pop %v1065
        %v1459 = vrcp.pop %v1068
        %v1460 = vrcp.pop %v1071
        %v1461 = vrcp.pop %v1074
        %v1462 = vrcp.pop %v1077
        %v1463 = vmul.f32 %v1171, %v1435
        %v1464 = vmul.f32 %v1173, %v1436
        %v1465 = vmul.f32 %v1176, %v1437
        %v1466 = vmul.f32 %v1178, %v1438
        %v1467 = vmul.f32 %v1181, %v1439
        %v1468 = vmul.f32 %v1183, %v1440
        %v1469 = vmul.f32 %v1186, %v1441
        %v1470 = vmul.f32 %v1253, %v1442
        %v1471 = vmul.f32 %v1255, %v1443
        %v1472 = vmul.f32 %v1258, %v1444
        %v1473 = vmul.f32 %v1260, %v1445
        %v1474 = vmul.f32 %v1263, %v1446
        %v1475 = vmul.f32 %v1265, %v1447
        %v1476 = vmul.f32 %v1268, %v1448
        %v1477 = vmul.f32 %v1335, %v1449
        %v1478 = vmul.f32 %v1337, %v1450
        %v1479 = vmul.f32 %v1340, %v1451
        %v1480 = vmul.f32 %v1342, %v1452
        %v1481 = vmul.f32 %v1345, %v1453
        %v1482 = vmul.f32 %v1347, %v1454
        %v1483 = vmul.f32 %v1350, %v1455
        %v1484 = vmul.f32 %v1417, %v1456
        %v1485 = vmul.f32 %v1419, %v1457
        %v1486 = vmul.f32 %v1422, %v1458
        %v1487 = vmul.f32 %v1424, %v1459
        %v1488 = vmul.f32 %v1427, %v1460
        %v1489 = vmul.f32 %v1429, %v1461
        %v1490 = vmul.f32 %v1432, %v1462
        %1491 = vst.msk [vmem:[%s369] sm:$0xff] %vm509, %v1463
        %1492 = vst.msk [vmem:[%s369 + $0x8] sm:$0xff] %vm509, %v1464
        %1493 = vst.msk [vmem:[%s369 + $0x10] sm:$0xff] %vm509, %v1465
        %1494 = vst.msk [vmem:[%s369 + $0x18] sm:$0xff] %vm509, %v1466
        %1495 = vst.msk [vmem:[%s369 + $0x20] sm:$0xff] %vm509, %v1467
        %1496 = vst.msk [vmem:[%s369 + $0x28] sm:$0xff] %vm509, %v1468
        %1497 = vst.msk [vmem:[%s369 + $0x30] sm:$0xff] %vm509, %v1469
        %1498 = vst.msk [vmem:[%s369 + $0x38] sm:$0xff] %vm509, %v1470
        %1499 = vst.msk [vmem:[%s369 + $0x40] sm:$0xff] %vm509, %v1471
        %1500 = vst.msk [vmem:[%s369 + $0x48] sm:$0xff] %vm509, %v1472
        %1501 = vst.msk [vmem:[%s369 + $0x50] sm:$0xff] %vm509, %v1473
        %1502 = vst.msk [vmem:[%s369 + $0x58] sm:$0xff] %vm509, %v1474
        %1503 = vst.msk [vmem:[%s369 + $0x60] sm:$0xff] %vm509, %v1475
        %1504 = vst.msk [vmem:[%s369 + $0x68] sm:$0xff] %vm509, %v1476
        %1505 = vst.msk [vmem:[%s369 + $0x70] sm:$0xff] %vm509, %v1477
        %1506 = vst.msk [vmem:[%s369 + $0x78] sm:$0xff] %vm509, %v1478
        %1507 = vst.msk [vmem:[%s369 + $0x80] sm:$0xff] %vm509, %v1479
        %1508 = vst.msk [vmem:[%s369 + $0x88] sm:$0xff] %vm509, %v1480
        %1509 = vst.msk [vmem:[%s369 + $0x90] sm:$0xff] %vm509, %v1481
        %1510 = vst.msk [vmem:[%s369 + $0x98] sm:$0xff] %vm509, %v1482
        %1511 = vst.msk [vmem:[%s369 + $0xa0] sm:$0xff] %vm509, %v1483
        %1512 = vst.msk [vmem:[%s369 + $0xa8] sm:$0xff] %vm509, %v1484
        %1513 = vst.msk [vmem:[%s369 + $0xb0] sm:$0xff] %vm509, %v1485
        %1514 = vst.msk [vmem:[%s369 + $0xb8] sm:$0xff] %vm509, %v1486
        %1515 = vst.msk [vmem:[%s369 + $0xc0] sm:$0xff] %vm509, %v1487
        %1516 = vst.msk [vmem:[%s369 + $0xc8] sm:$0xff] %vm509, %v1488
        %1517 = vst.msk [vmem:[%s369 + $0xd0] sm:$0xff] %vm509, %v1489
        %1518 = vst.msk [vmem:[%s369 + $0xd8] sm:$0xff] %vm509, %v1490
        %s1519 = sand.u32 %s159, 1
        %s1520 = scalar_lea.sflag [#allocation4], %s1519
        %s1521 = sand.u32 %s159, 1
        %s1522 = smul.addr %s1521, 224
        %s1523 = scalar_lea.vmem [#allocation10], %s1522
        // Predicated region
        $region53: #{tpu_custom_call.1} parent=35 // pred_check
          %p1524 = pneg %p169
        $region54: #{tpu_custom_call.1} parent=35 // pred_check_branch
          %1526 = sbr.rel (%p1524) target = $region56
        $region55: #{tpu_custom_call.1} parent=35 // pred_region
          %s1527 = smul.u32 4, %s32
          %1529 = vsyncadd %s1520, 0
          %s1530 = smul.addr %s1527, 7
          %s1531 = smul.addr %s31, 56
          %s1532 = sadd.s32 %s1530, %s1531
          %s1533 = smul.addr %s1532, 8
          %s1534 = scalar_lea.hbm %s4, %s1533
          %s1535 = sshll.u32 %s1523, 4
          %s1536 = int_to_ptr.vmem [resolvable:$true] %s1535
          %s1537 = sshll.u32 %s1534, 4
          %s1538 = int_to_ptr.hbm [resolvable:$true] %s1537
          %1543 = dma.vmem_to_hbm [thread:$0]  %s1536, 3584, %s1538, %s1520, 128, 128, 8
        $region56: #{tpu_custom_call.1} parent=35 // pred_fallthru
          _
      $region36: #{tpu_custom_call.1} parent=5 // pred_fallthru
        _
      %p1544 = scmp.le.s32.totalorder 2, %s22
      // Predicated region
      $region57: #{tpu_custom_call.1} parent=5 // pred_check
        %p1545 = pneg %p1544
      $region58: #{tpu_custom_call.1} parent=5 // pred_check_branch
        %1547 = sbr.rel (%p1545) target = $region60
      $region59: #{tpu_custom_call.1} parent=5 // pred_region
        %s1548 = ssub.s32 %s22, 2
        // Predicated region
        $region61: #{tpu_custom_call.1} parent=59 // pred_check
          %p1549 = pneg %p175
        $region62: #{tpu_custom_call.1} parent=59 // pred_check_branch
          %1551 = sbr.rel (%p1549) target = $region64
        $region63: #{tpu_custom_call.1} parent=59 // pred_region
          %s1552 = sand.u32 %s160, 1
          %s1553 = scalar_lea.sflag [#allocation4], %s1552
          %s1554 = sand.u32 %s160, 1
          %s1555 = smul.addr %s1554, 224
          %s1556 = scalar_lea.vmem [#allocation10], %s1555
          %1558 = dma.done %s1553, 3584
        $region64: #{tpu_custom_call.1} parent=59 // pred_fallthru
          _
      $region60: #{tpu_custom_call.1} parent=5 // pred_fallthru
        _
    $region6: #{tpu_custom_call.1} parent=1 // loop_footer
      %s26 = sadd.s32 1, %s22
    $region7: #{tpu_custom_call.1} parent=1 // loop_footer_branch
      %21 = sbr.rel target = $region3
    $region8: #{tpu_custom_call.1} parent=1 // loop_exit
      _
    %1559 = vsyncpa [#allocation3], 1
    %s1560 = scalar_lea.sflag [#allocation3], 1
    %1561 = vsyncpa %s1560, 1
    %1562 = vsyncpa [#allocation6], 1
    %s1563 = scalar_lea.sflag [#allocation6], 1
    %1564 = vsyncpa %s1563, 1
    %1565 = vsyncpa [#allocation9], 1
    %s1566 = scalar_lea.sflag [#allocation9], 1
    %1567 = vsyncpa %s1566, 1
    %1568 = vsyncpa [#allocation4], 1
    %s1569 = scalar_lea.sflag [#allocation4], 1
    %1570 = vsyncpa %s1569, 1

</llo_original>
